<compile_context>
chip_gen: v6e
topology: v6e:2x2x1
jax: 0.10.0
libtpu: 0.0.40
codegen_flags: <defaults>
</compile_context>

<pallas_src>
import functools

import jax
import jax.numpy as jnp
from jax.experimental import pallas as pl
from jax.experimental.pallas import tpu as pltpu


def _round_up(x, m):
    return (x + m - 1) // m * m


def _softmax_loss_kernel(alpha_ref, a_ref, p_ref, n_ref, o_ref,
                         pos_sc, m_sc, l_sc, *, n_valid, tn):
    nj = pl.program_id(1)

    # First N tile for this B tile: init online-logsumexp state and compute
    # pos_sim once (anchor/positive blocks are resident across the N loop).
    @pl.when(nj == 0)
    def _init():
        pos_sc[...] = jnp.sum(
            (a_ref[...] * p_ref[...]).astype(jnp.float32),
            axis=1, keepdims=True)                           # (TB, 1)
        m_sc[...] = jnp.full(m_sc.shape, -jnp.inf, jnp.float32)
        l_sc[...] = jnp.zeros(l_sc.shape, jnp.float32)

    # MXU: anchor-tile @ negative-tile.T, native input dtype, f32 accumulate.
    s = jax.lax.dot_general(
        a_ref[...], n_ref[...],
        dimension_numbers=(((1,), (1,)), ((), ())),
        preferred_element_type=jnp.float32)                  # (TB, TN)

    # Mask padded negative columns to -inf (they must not affect max/exp).
    col = nj * tn + jax.lax.broadcasted_iota(jnp.int32, s.shape, 1)
    s = jnp.where(col < n_valid, s, -jnp.inf)

    # Online, numerically stable logsumexp over the N axis.
    m_prev = m_sc[...]
    m_new = jnp.maximum(m_prev, jnp.max(s, axis=1, keepdims=True))
    scale = jnp.exp(m_prev - m_new)                          # 0 on first tile
    l_sc[...] = scale * l_sc[...] + jnp.sum(jnp.exp(s - m_new),
                                            axis=1, keepdims=True)
    m_sc[...] = m_new

    # Last N tile: finalize per-row loss for this B tile.
    @pl.when(nj == pl.num_programs(1) - 1)
    def _finalize():
        neg_sim = m_sc[...] + jnp.log(l_sc[...])             # (TB, 1)
        alpha = alpha_ref[0, 0]
        o_ref[...] = jnp.maximum(neg_sim - pos_sc[...] + alpha, 0.0)


def softmax_loss(anchor, positive, negative, alpha=1.0):
    """anchor: (B, D), positive: (B, D), negative: (N, D) -> scalar f32 loss."""
    B, D = anchor.shape
    N, _ = negative.shape

    # Tile sizes: lane-dense N tiles (multiple of 128), sublane-aligned B tiles.
    itemsize = jnp.dtype(anchor.dtype).itemsize
    sub = {4: 8, 2: 16, 1: 32}.get(itemsize, 8)
    TB = min(256, _round_up(B, sub))
    TN = min(512, _round_up(N, 128))
    Bp = _round_up(B, TB)
    Np = _round_up(N, TN)

    a = jnp.pad(anchor, ((0, Bp - B), (0, 0))) if Bp != B else anchor
    p = jnp.pad(positive, ((0, Bp - B), (0, 0))) if Bp != B else positive
    n = jnp.pad(negative, ((0, Np - N), (0, 0))) if Np != N else negative

    alpha_arr = jnp.full((1, 1), alpha, dtype=jnp.float32)

    # VMEM budget: double-buffered input tiles + output + scratch + (TB,TN) f32
    # intermediates, with 2x headroom, clamped under the v7x 64 MiB physical cap.
    vmem_bytes = (2 * (2 * TB * D + TN * D) * itemsize
                  + 2 * TB * 4          # output block (double-buffered)
                  + 3 * TB * 4          # f32 scratch
                  + 2 * TB * TN * 4)    # (TB, TN) f32 logits / exp intermediates
    vmem_limit = int(min(max(2 * vmem_bytes, 4 << 20), 64 << 20))

    grid = (Bp // TB, Np // TN)
    kernel = functools.partial(_softmax_loss_kernel, n_valid=N, tn=TN)

    per_row = pl.pallas_call(
        kernel,
        out_shape=jax.ShapeDtypeStruct((Bp, 1), jnp.float32),
        grid_spec=pltpu.PrefetchScalarGridSpec(
            num_scalar_prefetch=0,
            grid=grid,
            in_specs=[
                pl.BlockSpec(memory_space=pltpu.MemorySpace.SMEM),   # alpha
                pl.BlockSpec((TB, D), lambda i, j: (i, 0)),          # anchor
                pl.BlockSpec((TB, D), lambda i, j: (i, 0)),          # positive
                pl.BlockSpec((TN, D), lambda i, j: (j, 0)),          # negative
            ],
            out_specs=pl.BlockSpec((TB, 1), lambda i, j: (i, 0)),
            scratch_shapes=[
                pltpu.VMEM((TB, 1), jnp.float32),   # pos_sim
                pltpu.VMEM((TB, 1), jnp.float32),   # running max
                pltpu.VMEM((TB, 1), jnp.float32),   # running sum
            ],
        ),
        compiler_params=pltpu.CompilerParams(
            dimension_semantics=("parallel", "arbitrary"),
            vmem_limit_bytes=vmem_limit,
        ),
    )(alpha_arr, a, p, n)

    # Final mean over the true batch (padded rows sliced off). Doing this tiny
    # reduce in JAX keeps the B grid axis race-free under megacore "parallel".
    return jnp.mean(per_row[:B, 0])


def softmax_loss_ref(anchor, positive, negative, alpha=1.0):
    pos_sim = jnp.sum(anchor * positive, axis=1, keepdims=True)
    neg_mul = anchor @ negative.T
    neg_sim = jax.scipy.special.logsumexp(neg_mul, axis=1, keepdims=True)
    return jnp.mean(jnp.maximum(neg_sim - pos_sim + alpha, 0.0))


if __name__ == "__main__":
    key = jax.random.PRNGKey(0)
    k1, k2, k3 = jax.random.split(key, 3)
    B, D, N = 8, 32, 8   # batch of anchors/positives, embedding dim, #negatives
    anchor = jax.random.normal(k1, (B, D), dtype=jnp.float32)
    positive = jax.random.normal(k2, (B, D), dtype=jnp.float32)
    negative = jax.random.normal(k3, (N, D), dtype=jnp.float32)

    out = jax.block_until_ready(softmax_loss(anchor, positive, negative, alpha=1.0))
    ref = softmax_loss_ref(anchor, positive, negative, alpha=1.0)
    assert jnp.allclose(out, ref, atol=1e-5, rtol=1e-5), (out, ref)

    # Also exercise padding/masking paths (non-multiple N, larger B, new alpha).
    B2, N2 = 24, 200
    a2 = jax.random.normal(k1, (B2, D), dtype=jnp.float32)
    p2 = jax.random.normal(k2, (B2, D), dtype=jnp.float32)
    n2 = jax.random.normal(k3, (N2, D), dtype=jnp.float32)
    out2 = jax.block_until_ready(softmax_loss(a2, p2, n2, alpha=0.5))
    ref2 = softmax_loss_ref(a2, p2, n2, alpha=0.5)
    assert jnp.allclose(out2, ref2, atol=1e-5, rtol=1e-5), (out2, ref2)

    print("KERNEL_OK")
</pallas_src>

<mosaic_0001>
module attributes {stable_mosaic.version = 11 : i64} {
  func.func @_softmax_loss_kernel(%arg0: i32, %arg1: i32, %arg2: memref<1x1xf32, #tpu.memory_space<smem>>, %arg3: memref<8x32xf32, #tpu.memory_space<vmem>>, %arg4: memref<8x32xf32, #tpu.memory_space<vmem>>, %arg5: memref<128x32xf32, #tpu.memory_space<vmem>>, %arg6: memref<8x1xf32, #tpu.memory_space<vmem>>, %arg7: memref<8x1xf32, #tpu.memory_space<vmem>>, %arg8: memref<8x1xf32, #tpu.memory_space<vmem>>, %arg9: memref<8x1xf32, #tpu.memory_space<vmem>>) attributes {dimension_semantics = [#tpu.dimension_semantics<parallel>, #tpu.dimension_semantics<arbitrary>], iteration_bounds = array<i64: 1, 1>, scalar_prefetch = 0 : i64, scratch_operands = 3 : i64, tpu.core_type = #tpu.core_type<tc>, window_params = [{transform_indices = @transform_0, window_bounds = array<i64: 1, 1>}, {transform_indices = @transform_1, window_bounds = array<i64: 8, 32>}, {transform_indices = @transform_2, window_bounds = array<i64: 8, 32>}, {transform_indices = @transform_3, window_bounds = array<i64: 128, 32>}, {transform_indices = @transform_4, window_bounds = array<i64: 8, 1>}]} {
    %c0_i32 = arith.constant 0 : i32
    %0 = arith.cmpi eq, %arg1, %c0_i32 : i32
    %1 = arith.extui %0 : i1 to i32
    %c0_i32_0 = arith.constant 0 : i32
    %2 = arith.cmpi ne, %1, %c0_i32_0 : i32
    scf.if %2 {
      %c0_17 = arith.constant 0 : index
      %c0_18 = arith.constant 0 : index
      %33 = vector.load %arg3[%c0_17, %c0_18] : memref<8x32xf32, #tpu.memory_space<vmem>>, vector<8x32xf32>
      %c0_19 = arith.constant 0 : index
      %c0_20 = arith.constant 0 : index
      %34 = vector.load %arg4[%c0_19, %c0_20] : memref<8x32xf32, #tpu.memory_space<vmem>>, vector<8x32xf32>
      %35 = arith.mulf %33, %34 : vector<8x32xf32>
      %cst_21 = arith.constant dense<0.000000e+00> : vector<8xf32>
      %36 = vector.multi_reduction <add>, %35, %cst_21 [1] : vector<8x32xf32> to vector<8xf32>
      %37 = vector.shape_cast %36 : vector<8xf32> to vector<8x1xf32>
      %c0_22 = arith.constant 0 : index
      %c0_23 = arith.constant 0 : index
      %38 = vector.load %arg7[%c0_22, %c0_23] : memref<8x1xf32, #tpu.memory_space<vmem>>, vector<8x1xf32>
      tpu.vector_store %arg7[%c0_22, %c0_23], %37 {strides = array<i32>} : memref<8x1xf32, #tpu.memory_space<vmem>>, vector<8x1xf32>,
      %cst_24 = arith.constant 0xFF800000 : f32
      %39 = vector.broadcast %cst_24 : f32 to vector<8x1xf32>
      %c0_25 = arith.constant 0 : index
      %c0_26 = arith.constant 0 : index
      %40 = vector.load %arg8[%c0_25, %c0_26] : memref<8x1xf32, #tpu.memory_space<vmem>>, vector<8x1xf32>
      tpu.vector_store %arg8[%c0_25, %c0_26], %39 {strides = array<i32>} : memref<8x1xf32, #tpu.memory_space<vmem>>, vector<8x1xf32>,
      %cst_27 = arith.constant 0.000000e+00 : f32
      %41 = vector.broadcast %cst_27 : f32 to vector<8x1xf32>
      %c0_28 = arith.constant 0 : index
      %c0_29 = arith.constant 0 : index
      %42 = vector.load %arg9[%c0_28, %c0_29] : memref<8x1xf32, #tpu.memory_space<vmem>>, vector<8x1xf32>
      tpu.vector_store %arg9[%c0_28, %c0_29], %41 {strides = array<i32>} : memref<8x1xf32, #tpu.memory_space<vmem>>, vector<8x1xf32>,
    } else {
    }
    %c0 = arith.constant 0 : index
    %c0_1 = arith.constant 0 : index
    %3 = vector.load %arg3[%c0, %c0_1] : memref<8x32xf32, #tpu.memory_space<vmem>>, vector<8x32xf32>
    %c0_2 = arith.constant 0 : index
    %c0_3 = arith.constant 0 : index
    %4 = vector.load %arg5[%c0_2, %c0_3] : memref<128x32xf32, #tpu.memory_space<vmem>>, vector<128x32xf32>
    %cst = arith.constant dense<0.000000e+00> : vector<8x128xf32>
    %5 = tpu.matmul %3, %4, %cst {dimension_numbers = #tpu.dot_dimension_numbers<[1], [1], [0], [0], [0, 0, 1, 0], [], []>} : vector<8x32xf32>, vector<128x32xf32>, vector<8x128xf32> -> vector<8x128xf32>
    %c128_i32 = arith.constant 128 : i32
    %6 = arith.muli %arg1, %c128_i32 : i32
    %7 = tpu.iota {dimensions = array<i32: 1>} : vector<8x128xi32>
    %8 = vector.broadcast %6 : i32 to vector<8x128xi32>
    %9 = arith.addi %8, %7 : vector<8x128xi32>
    %c8_i32 = arith.constant 8 : i32
    %10 = vector.broadcast %c8_i32 : i32 to vector<8x128xi32>
    %11 = arith.cmpi slt, %9, %10 : vector<8x128xi32>
    %cst_4 = arith.constant 0xFF800000 : f32
    %12 = vector.broadcast %cst_4 : f32 to vector<8x128xf32>
    %13 = arith.select %11, %5, %12 : vector<8x128xi1>, vector<8x128xf32>
    %c0_5 = arith.constant 0 : index
    %c0_6 = arith.constant 0 : index
    %14 = vector.load %arg8[%c0_5, %c0_6] : memref<8x1xf32, #tpu.memory_space<vmem>>, vector<8x1xf32>
    %cst_7 = arith.constant dense<0xFF800000> : vector<8xf32>
    %15 = vector.multi_reduction <maximumf>, %13, %cst_7 [1] : vector<8x128xf32> to vector<8xf32>
    %16 = vector.shape_cast %15 : vector<8xf32> to vector<8x1xf32>
    %17 = arith.maximumf %14, %16 : vector<8x1xf32>
    %18 = arith.subf %14, %17 : vector<8x1xf32>
    %19 = math.exp %18 : vector<8x1xf32>
    %c0_8 = arith.constant 0 : index
    %c0_9 = arith.constant 0 : index
    %20 = vector.load %arg9[%c0_8, %c0_9] : memref<8x1xf32, #tpu.memory_space<vmem>>, vector<8x1xf32>
    %21 = arith.mulf %19, %20 : vector<8x1xf32>
    %22 = vector.broadcast %17 : vector<8x1xf32> to vector<8x128xf32>
    %23 = arith.subf %13, %22 : vector<8x128xf32>
    %24 = math.exp %23 : vector<8x128xf32>
    %cst_10 = arith.constant dense<0.000000e+00> : vector<8xf32>
    %25 = vector.multi_reduction <add>, %24, %cst_10 [1] : vector<8x128xf32> to vector<8xf32>
    %26 = vector.shape_cast %25 : vector<8xf32> to vector<8x1xf32>
    %27 = arith.addf %21, %26 : vector<8x1xf32>
    %c0_11 = arith.constant 0 : index
    %c0_12 = arith.constant 0 : index
    %28 = vector.load %arg9[%c0_11, %c0_12] : memref<8x1xf32, #tpu.memory_space<vmem>>, vector<8x1xf32>
    tpu.vector_store %arg9[%c0_11, %c0_12], %27 {strides = array<i32>} : memref<8x1xf32, #tpu.memory_space<vmem>>, vector<8x1xf32>,
    %c0_13 = arith.constant 0 : index
    %c0_14 = arith.constant 0 : index
    %29 = vector.load %arg8[%c0_13, %c0_14] : memref<8x1xf32, #tpu.memory_space<vmem>>, vector<8x1xf32>
    tpu.vector_store %arg8[%c0_13, %c0_14], %17 {strides = array<i32>} : memref<8x1xf32, #tpu.memory_space<vmem>>, vector<8x1xf32>,
    %c0_i32_15 = arith.constant 0 : i32
    %30 = arith.cmpi eq, %arg1, %c0_i32_15 : i32
    %31 = arith.extui %30 : i1 to i32
    %c0_i32_16 = arith.constant 0 : i32
    %32 = arith.cmpi ne, %31, %c0_i32_16 : i32
    scf.if %32 {
      %c0_17 = arith.constant 0 : index
      %c0_18 = arith.constant 0 : index
      %33 = vector.load %arg8[%c0_17, %c0_18] : memref<8x1xf32, #tpu.memory_space<vmem>>, vector<8x1xf32>
      %c0_19 = arith.constant 0 : index
      %c0_20 = arith.constant 0 : index
      %34 = vector.load %arg9[%c0_19, %c0_20] : memref<8x1xf32, #tpu.memory_space<vmem>>, vector<8x1xf32>
      %35 = math.log %34 : vector<8x1xf32>
      %36 = arith.addf %33, %35 : vector<8x1xf32>
      %c0_21 = arith.constant 0 : index
      %c0_22 = arith.constant 0 : index
      %37 = memref.load %arg2[%c0_21, %c0_22] : memref<1x1xf32, #tpu.memory_space<smem>>
      %c0_23 = arith.constant 0 : index
      %c0_24 = arith.constant 0 : index
      %38 = vector.load %arg7[%c0_23, %c0_24] : memref<8x1xf32, #tpu.memory_space<vmem>>, vector<8x1xf32>
      %39 = arith.subf %36, %38 : vector<8x1xf32>
      %40 = vector.broadcast %37 : f32 to vector<8x1xf32>
      %41 = arith.addf %39, %40 : vector<8x1xf32>
      %cst_25 = arith.constant 0.000000e+00 : f32
      %42 = vector.broadcast %cst_25 : f32 to vector<8x1xf32>
      %43 = arith.maximumf %41, %42 : vector<8x1xf32>
      %c0_26 = arith.constant 0 : index
      %c0_27 = arith.constant 0 : index
      %44 = vector.load %arg6[%c0_26, %c0_27] : memref<8x1xf32, #tpu.memory_space<vmem>>, vector<8x1xf32>
      tpu.vector_store %arg6[%c0_26, %c0_27], %43 {strides = array<i32>} : memref<8x1xf32, #tpu.memory_space<vmem>>, vector<8x1xf32>,
    } else {
    }
    return
  }
  func.func @transform_0(%arg0: i32, %arg1: i32) -> (i32, i32) {
    %c0_i32 = arith.constant 0 : i32
    %c0_i32_0 = arith.constant 0 : i32
    %c0_i32_1 = arith.constant 0 : i32
    return %c0_i32, %c0_i32_0 : i32, i32
  }
  func.func @transform_1(%arg0: i32, %arg1: i32) -> (i32, i32) {
    %c0_i32 = arith.constant 0 : i32
    %c0_i32_0 = arith.constant 0 : i32
    return %arg0, %c0_i32 : i32, i32
  }
  func.func @transform_2(%arg0: i32, %arg1: i32) -> (i32, i32) {
    %c0_i32 = arith.constant 0 : i32
    %c0_i32_0 = arith.constant 0 : i32
    return %arg0, %c0_i32 : i32, i32
  }
  func.func @transform_3(%arg0: i32, %arg1: i32) -> (i32, i32) {
    %c0_i32 = arith.constant 0 : i32
    %c0_i32_0 = arith.constant 0 : i32
    return %arg1, %c0_i32 : i32, i32
  }
  func.func @transform_4(%arg0: i32, %arg1: i32) -> (i32, i32) {
    %c0_i32 = arith.constant 0 : i32
    %c0_i32_0 = arith.constant 0 : i32
    return %arg0, %c0_i32 : i32, i32
  }
}

</mosaic_0001>

<llo_original>
// kernel: tpu_custom_call.1
$region0: #{tpu_custom_call.1}
  #allocation0 [shape = 'u32[]', space=smem, size = 0x4, offset = 0x4, fixed_abs, tag = 'smem constant byte address 0x4 - core index']
  #allocation1 [shape = 'u32[144,128]{1,0:T(1,128)}', space=vmem, size = 0x12000, scoped, tag = 'internal scratch']
  #allocation2 [shape = 'f32[8,1]{1,0:T(8,128)}', space=vmem, size = 0x1000, scoped, tag = 'scratch operand']
  #allocation3 [shape = 'f32[8,1]{1,0:T(8,128)}', space=vmem, size = 0x1000, scoped, tag = 'scratch operand']
  #allocation4 [shape = 'f32[8,1]{1,0:T(8,128)}', space=vmem, size = 0x1000, scoped, tag = 'scratch operand']
  #allocation5 [shape = 'f32[1,1]{1,0:T(1,128)S(6)}', space=smem, size = 0x200, scoped, tag = 'scoped memory for tpu_custom_call.1']
  %s0 = inlined_call_operand.<no memory space> [shape: f32[1,1], index: 0, kind: input, shape index: {}]
  %s1 = inlined_call_operand.vmem [shape: f32[8,32], index: 1, kind: input, shape index: {}]
  %s2 = inlined_call_operand.vmem [shape: f32[8,32], index: 2, kind: input, shape index: {}]
  %s3 = inlined_call_operand.vmem [shape: f32[128,32], index: 3, kind: input, shape index: {}]
  %s4 = inlined_call_operand.vmem [shape: f32[8,1], index: 4, kind: output, shape index: {}]
  %s5 = sld [smem:[#allocation0]]
  $region34: #{tpu_custom_call.1} parent=0
    _
  %s7 = ssub.s32 1, %s5
  %s8 = scalar_select 0, %s7, %s5
  %9 = sst [smem:[#allocation5]] %s0
  // Predicated region
  $region2: #{tpu_custom_call.1} parent=0 // pred_check
    _
  $region3: #{tpu_custom_call.1} parent=0 // pred_check_branch
    %11 = sbr.rel (0) target = $region5
  $region4: #{tpu_custom_call.1} parent=0 // pred_region
    _
  $region5: #{tpu_custom_call.1} parent=0 // pred_fallthru
    _
  // Predicated region
  $region6: #{tpu_custom_call.1} parent=0 // pred_check
    _
  $region7: #{tpu_custom_call.1} parent=0 // pred_check_branch
    %13 = sbr.rel (0) target = $region9
  $region8: #{tpu_custom_call.1} parent=0 // pred_region
    _
  $region9: #{tpu_custom_call.1} parent=0 // pred_fallthru
    _
  // Predicated region
  $region10: #{tpu_custom_call.1} parent=0 // pred_check
    _
  $region11: #{tpu_custom_call.1} parent=0 // pred_check_branch
    %15 = sbr.rel (0) target = $region13
  $region12: #{tpu_custom_call.1} parent=0 // pred_region
    _
  $region13: #{tpu_custom_call.1} parent=0 // pred_fallthru
    _
  // Predicated region
  $region14: #{tpu_custom_call.1} parent=0 // pred_check
    _
  $region15: #{tpu_custom_call.1} parent=0 // pred_check_branch
    %17 = sbr.rel (0) target = $region17
  $region16: #{tpu_custom_call.1} parent=0 // pred_region
    _
  $region17: #{tpu_custom_call.1} parent=0 // pred_fallthru
    _
  %p18 = scmp.eq.s32.totalorder 0, 0
  // Predicated region
  $region18: #{tpu_custom_call.1} parent=0 // pred_check
    %p19 = pneg %p18
  $region19: #{tpu_custom_call.1} parent=0 // pred_check_branch
    %21 = sbr.rel (%p19) target = $region21
  $region20: #{tpu_custom_call.1} parent=0 // pred_region
    %v22 = vld [vmem:[%s1] sm:$0xff]
    %v23 = vld [vmem:[%s2] sm:$0xff]
    %v24 = vmul.f32 %v22, %v23
    %vm25 = vcmask 261120
    %v26 = vsel %vm25, %v24, 0.0
    %27 = vadd.xlane.f32.xlu0 %v26
    %v28 = vpop.xlane.xlu0 %27
    %vm29 = vcmask 7168
    %30 = vst.msk [vmem:[#allocation2] sm:$0xff] %vm29, %v28
    %31 = vst.msk [vmem:[#allocation3] sm:$0xff] %vm29, -inf
    %32 = vst.msk [vmem:[#allocation4] sm:$0xff] %vm29, 0.0
  $region21: #{tpu_custom_call.1} parent=0 // pred_fallthru
    _
  %v33 = vld [vmem:[%s1] sm:$0xff]
  %v34 = vld [vmem:[%s3] sm:$0xff]
  %v35 = vld [vmem:[%s3 + $0x8] sm:$0xff]
  %v36 = vld [vmem:[%s3 + $0x10] sm:$0xff]
  %v37 = vld [vmem:[%s3 + $0x18] sm:$0xff]
  %v38 = vld [vmem:[%s3 + $0x20] sm:$0xff]
  %v39 = vld [vmem:[%s3 + $0x28] sm:$0xff]
  %v40 = vld [vmem:[%s3 + $0x30] sm:$0xff]
  %v41 = vld [vmem:[%s3 + $0x38] sm:$0xff]
  %v42 = vld [vmem:[%s3 + $0x40] sm:$0xff]
  %v43 = vld [vmem:[%s3 + $0x48] sm:$0xff]
  %v44 = vld [vmem:[%s3 + $0x50] sm:$0xff]
  %v45 = vld [vmem:[%s3 + $0x58] sm:$0xff]
  %v46 = vld [vmem:[%s3 + $0x60] sm:$0xff]
  %v47 = vld [vmem:[%s3 + $0x68] sm:$0xff]
  %v48 = vld [vmem:[%s3 + $0x70] sm:$0xff]
  %v49 = vld [vmem:[%s3 + $0x78] sm:$0xff]
  %vm50 = vcmask 261120
  %v52 = vsel %vm50, %v33, 0
  %v55 = vsel %vm50, %v34, 0
  %v58 = vsel %vm50, %v35, 0
  %v61 = vsel %vm50, %v36, 0
  %v64 = vsel %vm50, %v37, 0
  %v67 = vsel %vm50, %v38, 0
  %v70 = vsel %vm50, %v39, 0
  %v73 = vsel %vm50, %v40, 0
  %v76 = vsel %vm50, %v41, 0
  %v79 = vsel %vm50, %v42, 0
  %v82 = vsel %vm50, %v43, 0
  %v85 = vsel %vm50, %v44, 0
  %v88 = vsel %vm50, %v45, 0
  %v91 = vsel %vm50, %v46, 0
  %v94 = vsel %vm50, %v47, 0
  %v97 = vsel %vm50, %v48, 0
  %v100 = vsel %vm50, %v49, 0
  %102 = vmatprep.subr.mxu0 0.0
  %103 = vmatpush1.xpose.msra.mxu0 %v100
  %104 = vmatprep.subr.mxu0 0.0
  %105 = vmatpush1.xpose.msra.mxu0 %v97
  %106 = vmatprep.subr.mxu0 0.0
  %107 = vmatpush1.xpose.msra.mxu0 %v94
  %108 = vmatprep.subr.mxu0 0.0
  %109 = vmatpush1.xpose.msra.mxu0 %v91
  %110 = vmatprep.subr.mxu0 0.0
  %111 = vmatpush1.xpose.msra.mxu0 %v88
  %112 = vmatprep.subr.mxu0 0.0
  %113 = vmatpush1.xpose.msra.mxu0 %v85
  %114 = vmatprep.subr.mxu0 0.0
  %115 = vmatpush1.xpose.msra.mxu0 %v82
  %116 = vmatprep.subr.mxu0 0.0
  %117 = vmatpush1.xpose.msra.mxu0 %v79
  %118 = vmatprep.subr.mxu0 0.0
  %119 = vmatpush1.xpose.msra.mxu0 %v76
  %120 = vmatprep.subr.mxu0 0.0
  %121 = vmatpush1.xpose.msra.mxu0 %v73
  %122 = vmatprep.subr.mxu0 0.0
  %123 = vmatpush1.xpose.msra.mxu0 %v70
  %124 = vmatprep.subr.mxu0 0.0
  %125 = vmatpush1.xpose.msra.mxu0 %v67
  %126 = vmatprep.subr.mxu0 0.0
  %127 = vmatpush1.xpose.msra.mxu0 %v64
  %128 = vmatprep.subr.mxu0 0.0
  %129 = vmatpush1.xpose.msra.mxu0 %v61
  %130 = vmatprep.subr.mxu0 0.0
  %131 = vmatpush1.xpose.msra.mxu0 %v58
  %132 = vmatprep.subr.mxu0 0.0
  %133 = vmatpush1.xpose.msra.mxu0 %v55
  %134 = vmatprep.subr.mxu0 0.0
  %135 = vmatpush2.xpose.msra.mxu0 0.0
  %136 = vmatprep.subr.mxu0 0.0
  %137 = vmatpush2.xpose.msra.mxu0 0.0
  %138 = vmatprep.subr.mxu0 0.0
  %139 = vmatpush2.xpose.msra.mxu0 0.0
  %140 = vmatprep.subr.mxu0 0.0
  %141 = vmatpush2.xpose.msra.mxu0 0.0
  %142 = vmatprep.subr.mxu0 0.0
  %143 = vmatpush2.xpose.msra.mxu0 0.0
  %144 = vmatprep.subr.mxu0 0.0
  %145 = vmatpush2.xpose.msra.mxu0 0.0
  %146 = vmatprep.subr.mxu0 0.0
  %147 = vmatpush2.xpose.msra.mxu0 0.0
  %148 = vmatprep.subr.mxu0 0.0
  %149 = vmatpush2.xpose.msra.mxu0 0.0
  %150 = vmatprep.subr.mxu0 0.0
  %151 = vmatpush2.xpose.msra.mxu0 0.0
  %152 = vmatprep.subr.mxu0 0.0
  %153 = vmatpush2.xpose.msra.mxu0 0.0
  %154 = vmatprep.subr.mxu0 0.0
  %155 = vmatpush2.xpose.msra.mxu0 0.0
  %156 = vmatprep.subr.mxu0 0.0
  %157 = vmatpush2.xpose.msra.mxu0 0.0
  %158 = vmatprep.subr.mxu0 0.0
  %159 = vmatpush2.xpose.msra.mxu0 0.0
  %160 = vmatprep.subr.mxu0 0.0
  %161 = vmatpush2.xpose.msra.mxu0 0.0
  %162 = vmatprep.subr.mxu0 0.0
  %163 = vmatpush2.xpose.msra.mxu0 0.0
  %164 = vmatprep.subr.mxu0 0.0
  %165 = vmatpush2.xpose.msra.mxu0 0.0
  %166 = vmatprep.mubr.f32.mxu0 0.0
  %167 = vmatmul.mubr.f32.gmra.mxu0 %v52
  %v168 = vpop.f32.mrf.mxu0
  %v169 = vadd.f32 0.0, %v168
  %v170 = vpop.f32.mrf.mxu0
  %171 = vdwg.mxu0
  %s172 = smul.u32 0, 128
  %v173 = vlaneseq
  %v174 = vand.u32 %v173, 127
  %v175 = vstv %s172
  %v176 = vadd.s32 %v175, %v174
  %vm177 = vcmp.lt.s32.totalorder %v176, 8
  %v178 = vsel %vm177, %v169, -inf
  %v179 = vld [vmem:[#allocation3] sm:$0xff]
  %180 = vmax.xlane.f32.xlu0 %v178
  %v181 = vpop.xlane.xlu0 %180
  %v182 = vmax.f32 %v179, %v181
  %v183 = vsub.f32 %v179, %v182
  %v184 = vmul.f32 %v183, 1.442695
  %v185 = vpow.pop %v184
  %v186 = vld [vmem:[#allocation4] sm:$0xff]
  %v187 = vmul.f32 %v185, %v186
  %189 = vset.pattern.permute.xlu0 0
  %190 = vperm.xlu0 %189, %v182
  %v191 = vpop.permute.xlu0 %190
  %v193 = vsub.f32 %v178, %v191
  %v194 = vmul.f32 %v193, 1.442695
  %v195 = vpow.pop %v194
  %196 = vadd.xlane.f32.xlu0 %v195
  %v197 = vpop.xlane.xlu0 %196
  %v198 = vadd.f32 %v187, %v197
  %vm199 = vcmask 7168
  %200 = vst.msk [vmem:[#allocation4] sm:$0xff] %vm199, %v198
  %201 = vst.msk [vmem:[#allocation3] sm:$0xff] %vm199, %v182
  // Predicated region
  $region22: #{tpu_custom_call.1} parent=0 // pred_check
    %p202 = pneg %p18
  $region23: #{tpu_custom_call.1} parent=0 // pred_check_branch
    %204 = sbr.rel (%p202) target = $region25
  $region24: #{tpu_custom_call.1} parent=0 // pred_region
    %v205 = vld [vmem:[#allocation3] sm:$0xff]
    %v206 = vld [vmem:[#allocation4] sm:$0xff]
    %v207 = vlog2.pop %v206
    %v208 = vmul.f32 %v207, 0.6931472
    %v209 = vadd.f32 %v205, %v208
    %s210 = sld [smem:[#allocation5]]
    %v211 = vld [vmem:[#allocation2] sm:$0xff]
    %v212 = vsub.f32 %v209, %v211
    %v213 = vstv %s210
    %v214 = vadd.f32 %v212, %v213
    %v215 = vmax.f32 %v214, 0.0
    %216 = vst.msk [vmem:[%s4] sm:$0xff] %vm199, %v215
  $region25: #{tpu_custom_call.1} parent=0 // pred_fallthru
    _
  // Predicated region
  $region26: #{tpu_custom_call.1} parent=0 // pred_check
    _
  $region27: #{tpu_custom_call.1} parent=0 // pred_check_branch
    %218 = sbr.rel (0) target = $region29
  $region28: #{tpu_custom_call.1} parent=0 // pred_region
    _
  $region29: #{tpu_custom_call.1} parent=0 // pred_fallthru
    _
  // Predicated region
  $region30: #{tpu_custom_call.1} parent=0 // pred_check
    _
  $region31: #{tpu_custom_call.1} parent=0 // pred_check_branch
    %220 = sbr.rel (0) target = $region33
  $region32: #{tpu_custom_call.1} parent=0 // pred_region
    _
  $region33: #{tpu_custom_call.1} parent=0 // pred_fallthru
    _

</llo_original>
